<compile_context>
chip_gen: v7x
topology: tpu7x:2x2x1
jax: 0.10.0
libtpu: 0.0.40
codegen_flags: <defaults>
</compile_context>

<pallas_src>
import functools

import jax
import jax.numpy as jnp
from jax.experimental import pallas as pl
from jax.experimental.pallas import tpu as pltpu


def _round_up(x, m):
    return ((x + m - 1) // m) * m


def _fir_kernel(x_halo_ref, x_curr_ref, o_ref, win_ref, *,
                nonzero_taps, pad, S, S_tile, H):
    """One (B_tile, S_tile) output tile of the FIR cross-correlation.

    x_halo_ref: VMEM (B_tile, H)        left-halo tile of raw x (128-aligned)
    x_curr_ref: VMEM (B_tile, S_tile)   aligned tile of raw x covering [n0, n0+S_tile)
    o_ref:      VMEM (B_tile, S_tile)   filtered output tile (f32)
    win_ref:    VMEM (B_tile, H+S_tile) scratch window; col c <-> x[n0 - H + c]
    """
    B_tile = o_ref.shape[0]
    n0 = pl.program_id(1) * S_tile            # first output column of this tile

    # Assemble the contiguous x window feeding this tile (upcast to f32 once).
    win_ref[:, :H] = x_halo_ref[...].astype(jnp.float32)
    win_ref[:, H:] = x_curr_ref[...].astype(jnp.float32)

    lane = jax.lax.broadcasted_iota(jnp.int32, (B_tile, S_tile), 1)
    g0 = lane + (n0 - pad)                     # global x index for tap offset k=0

    acc = None
    # nonzero_taps is a tiny static tuple ((0, 1.0), (d, -coef)) -> fully unrolled.
    for k, w in nonzero_taps:
        off = H - pad + k                      # static lane offset into the window
        vals = win_ref[:, off:off + S_tile]    # candidate x[n0 - pad + k + lane]
        g = g0 + k                             # intended global x column index
        vals = jnp.where((g >= 0) & (g < S), vals, 0.0)   # realizes conv1d zero-pad
        if w != 1.0:                           # unit tap folded (no multiply)
            vals = vals * jnp.float32(w)
        acc = vals if acc is None else acc + vals
    o_ref[...] = acc


def make_fir_taps(filter_type="hp", coef=0.85, ntaps=101):
    """Deterministic parameter construction (mirrors the module __init__).

    Returns taps as a Python tuple so they are baked into the kernel as
    compile-time constants (zero tap skipped, unit tap folded).
    """
    if ntaps % 2 == 0:
        raise ValueError(f"ntaps must be odd (ntaps={ntaps}).")
    if filter_type == "hp":
        taps = (1.0, -float(coef), 0.0)
    elif filter_type == "fd":
        taps = (1.0, 0.0, -float(coef))
    else:
        # TODO(synk): 'lp'/'aw' need scipy-designed taps; not implemented here.
        raise NotImplementedError(f"filter_type={filter_type!r} not implemented")
    return taps, ntaps


def perceptual_fir_filter(x, taps, ntaps, *, s_tile=None, b_tile=None):
    """Forward pass: matches PerceptualFIRFilter.forward for 'hp'/'fd'."""
    # --- glue (plain JAX): reshape handling identical to the torch module ---
    # NOTE: like the torch module, a (1, 1, S) input collapses to 1-D and is
    #       not supported (torch's conv1d would also reject it).
    if x.ndim > 2:
        x = jnp.squeeze(x)
    if x.ndim == 2:
        x = x[:, None, :]                       # (B, 1, S)
    B, C, S = x.shape
    assert C == 1, "FIR conv has a single input channel"

    pad = ntaps // 2                            # torch forward uses ntaps//2 regardless of K
    K = len(taps)
    if pad < K - 1:
        raise NotImplementedError("requires padding >= kernel_size - 1")
    S_out = S + 2 * pad - K + 1
    nonzero_taps = tuple((k, float(w)) for k, w in enumerate(taps) if float(w) != 0.0)

    # --- tiling choices -------------------------------------------------
    H = max(128, _round_up(pad, 128))           # left-halo width (lane aligned)
    if s_tile is None:
        s_tile = min(2048, _round_up(S_out, 128))   # big lane-dense tiles -> near roofline
    s_tile = max(H, _round_up(int(s_tile), H))  # multiple of H (hence of 128)
    if b_tile is None:
        b_tile = min(B, 8)
    b_tile = max(1, min(int(b_tile), B))

    x2 = x[:, 0, :]                             # (B, S), original dtype (f32 or bf16)
    # Only toy inputs (S smaller than one tile) get padded; large signals are
    # read directly from HBM with no wrapper-side copy.
    S_eff = max(S, s_tile)
    if S_eff > S:
        x2 = jnp.pad(x2, ((0, 0), (0, S_eff - S)))

    grid_b = pl.cdiv(B, b_tile)
    grid_s = pl.cdiv(S_out, s_tile)
    n_curr_blocks = pl.cdiv(S_eff, s_tile)
    n_halo_blocks = pl.cdiv(S_eff, H)
    ratio = s_tile // H

    def halo_map(b, j):
        # Halo covers x columns [n0 - H, n0); clamp at the edges (masked in-kernel).
        return (b, jnp.maximum(jnp.minimum(j * ratio - 1, n_halo_blocks - 1), 0))

    def curr_map(b, j):
        return (b, jnp.minimum(j, n_curr_blocks - 1))

    itemsize = jnp.dtype(x2.dtype).itemsize
    cost = pl.CostEstimate(
        flops=int(2 * len(nonzero_taps) * B * S_out),
        transcendentals=0,
        bytes_accessed=int(B * S_eff * itemsize
                           + grid_s * B * H * itemsize
                           + B * S_out * 4),
    )

    out = pl.pallas_call(
        functools.partial(_fir_kernel, nonzero_taps=nonzero_taps, pad=pad,
                          S=S, S_tile=s_tile, H=H),
        out_shape=jax.ShapeDtypeStruct((B, S_out), jnp.float32),
        grid=(grid_b, grid_s),
        in_specs=[
            pl.BlockSpec((b_tile, H), halo_map),        # left-halo tile of raw x
            pl.BlockSpec((b_tile, s_tile), curr_map),   # aligned tile of raw x
        ],
        out_specs=pl.BlockSpec((b_tile, s_tile), lambda b, j: (b, j)),
        scratch_shapes=[pltpu.VMEM((b_tile, H + s_tile), jnp.float32)],
        compiler_params=pltpu.CompilerParams(
            dimension_semantics=("parallel", "parallel")),
        cost_estimate=cost,
    )(x2, x2)

    # final .squeeze() as in the torch forward
    return jnp.squeeze(out)


def _reference(x, taps, ntaps):
    """Pure-JAX reference for verification."""
    if x.ndim > 2:
        x = jnp.squeeze(x)
    if x.ndim == 2:
        x = x[:, None, :]
    B, _, S = x.shape
    pad = ntaps // 2
    K = len(taps)
    S_out = S + 2 * pad - K + 1
    xp = jnp.pad(x[:, 0, :].astype(jnp.float32), ((0, 0), (pad, pad)))
    out = jnp.zeros((B, S_out), jnp.float32)
    for k in range(K):
        out = out + float(taps[k]) * xp[:, k:k + S_out]
    return jnp.squeeze(out)


if __name__ == "__main__":
    key = jax.random.PRNGKey(0)
    k1, k2, k3 = jax.random.split(key, 3)

    # (B, #channels=1, #samples) as the module's forward expects
    x = jax.random.normal(k1, (2, 1, 16), dtype=jnp.float32)
    taps_hp, ntaps_hp = make_fir_taps(filter_type="hp", coef=0.85, ntaps=101)
    y = jax.block_until_ready(perceptual_fir_filter(x, taps_hp, ntaps_hp))
    y_ref = _reference(x, taps_hp, ntaps_hp)
    assert y.shape == y_ref.shape, (y.shape, y_ref.shape)
    assert jnp.allclose(y, y_ref, atol=1e-5, rtol=1e-5)

    # Multi-tile path ('fd' filter, forced small tile to exercise halo / edge masks).
    x2 = jax.random.normal(k2, (2, 1, 300), dtype=jnp.float32)
    taps_fd, ntaps_fd = make_fir_taps(filter_type="fd", coef=0.85, ntaps=101)
    y2 = jax.block_until_ready(perceptual_fir_filter(x2, taps_fd, ntaps_fd, s_tile=128))
    y2_ref = _reference(x2, taps_fd, ntaps_fd)
    assert y2.shape == y2_ref.shape, (y2.shape, y2_ref.shape)
    assert jnp.allclose(y2, y2_ref, atol=1e-5, rtol=1e-5)

    # bf16 input path (upcast inside the kernel, f32 accumulation / output).
    x3 = jax.random.normal(k3, (2, 1, 16), dtype=jnp.float32).astype(jnp.bfloat16)
    y3 = jax.block_until_ready(perceptual_fir_filter(x3, taps_hp, ntaps_hp))
    y3_ref = _reference(x3, taps_hp, ntaps_hp)
    assert y3.shape == y3_ref.shape, (y3.shape, y3_ref.shape)
    assert jnp.allclose(y3, y3_ref, atol=1e-5, rtol=1e-5)

    print("KERNEL_OK")
</pallas_src>

<mosaic_0001>
module attributes {stable_mosaic.version = 11 : i64} {
  func.func @_fir_kernel(%arg0: i32, %arg1: i32, %arg2: memref<2x128xf32, #tpu.memory_space<vmem>>, %arg3: memref<2x128xf32, #tpu.memory_space<vmem>>, %arg4: memref<2x128xf32, #tpu.memory_space<vmem>>, %arg5: memref<2x256xf32, #tpu.memory_space<vmem>>) attributes {dimension_semantics = [#tpu.dimension_semantics<parallel>, #tpu.dimension_semantics<parallel>], iteration_bounds = array<i64: 1, 1>, scalar_prefetch = 0 : i64, scratch_operands = 1 : i64, tpu.core_type = #tpu.core_type<tc>, window_params = [{transform_indices = @transform_0, window_bounds = array<i64: 2, 128>}, {transform_indices = @transform_1, window_bounds = array<i64: 2, 128>}, {transform_indices = @transform_2, window_bounds = array<i64: 2, 128>}]} {
    %c128_i32 = arith.constant 128 : i32
    %0 = arith.muli %arg1, %c128_i32 : i32
    %c0 = arith.constant 0 : index
    %c0_0 = arith.constant 0 : index
    %1 = vector.load %arg2[%c0, %c0_0] : memref<2x128xf32, #tpu.memory_space<vmem>>, vector<2x128xf32>
    %c0_1 = arith.constant 0 : index
    %c0_2 = arith.constant 0 : index
    %2 = vector.load %arg5[%c0_1, %c0_2] : memref<2x256xf32, #tpu.memory_space<vmem>>, vector<2x128xf32>
    tpu.vector_store %arg5[%c0_1, %c0_2], %1 {strides = array<i32>} : memref<2x256xf32, #tpu.memory_space<vmem>>, vector<2x128xf32>,
    %c0_3 = arith.constant 0 : index
    %c0_4 = arith.constant 0 : index
    %3 = vector.load %arg3[%c0_3, %c0_4] : memref<2x128xf32, #tpu.memory_space<vmem>>, vector<2x128xf32>
    %c0_5 = arith.constant 0 : index
    %c128 = arith.constant 128 : index
    %4 = vector.load %arg5[%c0_5, %c128] : memref<2x256xf32, #tpu.memory_space<vmem>>, vector<2x128xf32>
    tpu.vector_store %arg5[%c0_5, %c128], %3 {strides = array<i32>} : memref<2x256xf32, #tpu.memory_space<vmem>>, vector<2x128xf32>,
    %5 = tpu.iota {dimensions = array<i32: 1>} : vector<2x128xi32>
    %c50_i32 = arith.constant 50 : i32
    %6 = arith.subi %0, %c50_i32 : i32
    %7 = vector.broadcast %6 : i32 to vector<2x128xi32>
    %8 = arith.addi %5, %7 : vector<2x128xi32>
    %c0_6 = arith.constant 0 : index
    %c78 = arith.constant 78 : index
    %9 = vector.load %arg5[%c0_6, %c78] : memref<2x256xf32, #tpu.memory_space<vmem>>, vector<2x128xf32>
    %c0_i32 = arith.constant 0 : i32
    %10 = vector.broadcast %c0_i32 : i32 to vector<2x128xi32>
    %11 = arith.addi %8, %10 : vector<2x128xi32>
    %c0_i32_7 = arith.constant 0 : i32
    %12 = vector.broadcast %c0_i32_7 : i32 to vector<2x128xi32>
    %13 = arith.cmpi sge, %11, %12 : vector<2x128xi32>
    %c16_i32 = arith.constant 16 : i32
    %14 = vector.broadcast %c16_i32 : i32 to vector<2x128xi32>
    %15 = arith.cmpi slt, %11, %14 : vector<2x128xi32>
    %16 = arith.andi %13, %15 : vector<2x128xi1>
    %cst = arith.constant 0.000000e+00 : f32
    %17 = vector.broadcast %cst : f32 to vector<2x128xf32>
    %18 = arith.select %16, %9, %17 : vector<2x128xi1>, vector<2x128xf32>
    %c0_8 = arith.constant 0 : index
    %c79 = arith.constant 79 : index
    %19 = vector.load %arg5[%c0_8, %c79] : memref<2x256xf32, #tpu.memory_space<vmem>>, vector<2x128xf32>
    %c1_i32 = arith.constant 1 : i32
    %20 = vector.broadcast %c1_i32 : i32 to vector<2x128xi32>
    %21 = arith.addi %8, %20 : vector<2x128xi32>
    %c0_i32_9 = arith.constant 0 : i32
    %22 = vector.broadcast %c0_i32_9 : i32 to vector<2x128xi32>
    %23 = arith.cmpi sge, %21, %22 : vector<2x128xi32>
    %c16_i32_10 = arith.constant 16 : i32
    %24 = vector.broadcast %c16_i32_10 : i32 to vector<2x128xi32>
    %25 = arith.cmpi slt, %21, %24 : vector<2x128xi32>
    %26 = arith.andi %23, %25 : vector<2x128xi1>
    %cst_11 = arith.constant 0.000000e+00 : f32
    %27 = vector.broadcast %cst_11 : f32 to vector<2x128xf32>
    %28 = arith.select %26, %19, %27 : vector<2x128xi1>, vector<2x128xf32>
    %cst_12 = arith.constant -8.500000e-01 : f32
    %29 = vector.broadcast %cst_12 : f32 to vector<2x128xf32>
    %30 = arith.mulf %28, %29 : vector<2x128xf32>
    %31 = arith.addf %18, %30 : vector<2x128xf32>
    %c0_13 = arith.constant 0 : index
    %c0_14 = arith.constant 0 : index
    %32 = vector.load %arg4[%c0_13, %c0_14] : memref<2x128xf32, #tpu.memory_space<vmem>>, vector<2x128xf32>
    tpu.vector_store %arg4[%c0_13, %c0_14], %31 {strides = array<i32>} : memref<2x128xf32, #tpu.memory_space<vmem>>, vector<2x128xf32>,
    return
  }
  func.func @transform_0(%arg0: i32, %arg1: i32) -> (i32, i32) {
    %c1_i32 = arith.constant 1 : i32
    %0 = arith.muli %arg1, %c1_i32 : i32
    %c1_i32_0 = arith.constant 1 : i32
    %1 = arith.subi %0, %c1_i32_0 : i32
    %c0_i32 = arith.constant 0 : i32
    %2 = arith.minsi %1, %c0_i32 : i32
    %c0_i32_1 = arith.constant 0 : i32
    %3 = arith.maxsi %2, %c0_i32_1 : i32
    %c0_i32_2 = arith.constant 0 : i32
    return %arg0, %3 : i32, i32
  }
  func.func @transform_1(%arg0: i32, %arg1: i32) -> (i32, i32) {
    %c0_i32 = arith.constant 0 : i32
    %0 = arith.minsi %arg1, %c0_i32 : i32
    %c0_i32_0 = arith.constant 0 : i32
    return %arg0, %0 : i32, i32
  }
  func.func @transform_2(%arg0: i32, %arg1: i32) -> (i32, i32) {
    %c0_i32 = arith.constant 0 : i32
    return %arg0, %arg1 : i32, i32
  }
}

</mosaic_0001>

<llo_original>
// kernel: tpu_custom_call.1
$region0: #{tpu_custom_call.1}
  #allocation0 [shape = 'u32[]', space=smem, size = 0x4, offset = 0x4, fixed_abs, tag = 'smem constant byte address 0x4 - core index']
  #allocation1 [shape = 'u32[144,128]{1,0:T(1,128)}', space=vmem, size = 0x12000, scoped, tag = 'internal scratch']
  #allocation2 [shape = 'f32[2,256]{1,0:T(2,128)}', space=vmem, size = 0x800, scoped, tag = 'scratch operand']
  %s0 = inlined_call_operand.hbm [shape: f32[2,128], index: 0, kind: input, shape index: {}]
  %s1 = inlined_call_operand.vmem [shape: f32[2,128], index: 1, kind: input, shape index: {}]
  %s2 = inlined_call_operand.hbm [shape: f32[2,114], index: 2, kind: output, shape index: {}]
  %s3 = sld [smem:[#allocation0]]
  $region22: #{tpu_custom_call.1} parent=0
    _
  %s5 = ssub.s32 1, %s3
  %s6 = scalar_select 0, %s5, %s3
  $region1: #{tpu_custom_call.1} parent=0
    #allocation3 [shape = 'u8[1024]{0}', space=vmem, size = 0x400, scoped, tag = 'input window, operand 0, single buffered']
    #allocation4 [shape = 's32[1]{0}', space=sflag, size = 0x4, scoped, tag = 'scoped memory for tpu_custom_call.1']
    #allocation5 [shape = 's32[1]{0}', space=sflag, size = 0x4, scoped, tag = 'scoped memory for tpu_custom_call.1']
    #allocation6 [shape = 'u8[1024]{0}', space=vmem, size = 0x400, scoped, tag = 'output window, operand 0, single buffered']
    %7 = vsyncpa [#allocation4], 0
    %8 = vsyncpa [#allocation5], 0
    // Predicated region
    $region2: #{tpu_custom_call.1} parent=1 // pred_check
      _
    $region3: #{tpu_custom_call.1} parent=1 // pred_check_branch
      %10 = sbr.rel (0) target = $region5
    $region4: #{tpu_custom_call.1} parent=1 // pred_region
      %s11 = ssub.s32 0, 1
      %p12 = scmp.lt.s32.totalorder %s11, 0
      %s13 = scalar_select %p12, %s11, 0
      %p14 = scmp.gt.s32.totalorder %s13, 0
      %s15 = scalar_select %p14, %s13, 0
      %s17 = ssub.s32 32, 32
      %18 = vsyncadd [#allocation4], %s17
      %s19 = smul.addr %s15, 32
      %s20 = scalar_lea.hbm %s0, %s19
      %s22 = sshll.u32 [#allocation3], 4
      %s23 = int_to_ptr.vmem [resolvable:$true] %s22
      %25 = dma.hbm_to_vmem [thread:$0]  %s20, 32, %s23, [#allocation4]
    $region5: #{tpu_custom_call.1} parent=1 // pred_fallthru
      _
    // Predicated region
    $region6: #{tpu_custom_call.1} parent=1 // pred_check
      _
    $region7: #{tpu_custom_call.1} parent=1 // pred_check_branch
      %27 = sbr.rel (0) target = $region9
    $region8: #{tpu_custom_call.1} parent=1 // pred_region
      _
    $region9: #{tpu_custom_call.1} parent=1 // pred_fallthru
      _
    // Predicated region
    $region10: #{tpu_custom_call.1} parent=1 // pred_check
      _
    $region11: #{tpu_custom_call.1} parent=1 // pred_check_branch
      %29 = sbr.rel (0) target = $region13
    $region12: #{tpu_custom_call.1} parent=1 // pred_region
      %30 = dma.done [#allocation4], 32
    $region13: #{tpu_custom_call.1} parent=1 // pred_fallthru
      _
    %s31 = ssub.s32 0, 1
    %p32 = scmp.lt.s32.totalorder %s31, 0
    %s33 = scalar_select %p32, %s31, 0
    %p34 = scmp.gt.s32.totalorder %s33, 0
    %s35 = scalar_select %p34, %s33, 0
    %s36 = smul.u32 0, 128
    %v37 = vld [vmem:[#allocation3] sm:$0x3]
    %38 = vst [vmem:[#allocation2] sm:$0x3] %v37
    %v39 = vld [vmem:[%s1] sm:$0x3]
    %40 = vst [vmem:[#allocation2 + $0x2] sm:$0x3] %v39
    %v41 = vlaneseq
    %v42 = vand.u32 %v41, 127
    %s43 = ssub.s32 %s36, 50
    %v44 = vstv %s43
    %v45 = vadd.s32 %v42, %v44
    %v46 = vld [vmem:[#allocation2] sm:$0xf]
    %vm47 = vcmp.ge.s32.totalorder %v45, 0
    %vm48 = vcmp.lt.s32.totalorder %v45, 16
    %vm49 = vmand %vm47, %vm48
    %v52 = vunpack.c.l.s4 1983009808
    %v53 = vunpack.c.0.s8 %v52
    %v54 = vlaneseq
    %v55 = vshrl.u32 %v54, 7
    %v56 = vsub.s32 %v53, %v55
    %v57 = vrot.slane %v46, %v56
    %v58 = vcombine.high %v57, %v57
    %59 = vrot.lane.b32.xlu0 %v57, 50
    %v60 = vpop.permute.xlu0 %59
    %61 = vrot.lane.b32.xlu0 %v58, 50
    %v62 = vpop.permute.xlu0 %61
    %vm63 = vcmask 408576
    %v64 = vsel %vm63, %v60, %v62
    %v66 = vsel %vm49, %v64, 0.0
    %v67 = vadd.s32 %v45, 1
    %vm68 = vcmp.ge.s32.totalorder %v67, 0
    %vm69 = vcmp.lt.s32.totalorder %v67, 16
    %vm70 = vmand %vm68, %vm69
    %71 = vrot.lane.b32.xlu0 %v57, 49
    %v72 = vpop.permute.xlu0 %71
    %73 = vrot.lane.b32.xlu0 %v58, 49
    %v74 = vpop.permute.xlu0 %73
    %vm75 = vcmask 400384
    %v76 = vsel %vm75, %v72, %v74
    %v78 = vsel %vm70, %v76, 0.0
    %v79 = vmul.f32 %v78, -0.85
    %v80 = vadd.f32 %v66, %v79
    %81 = vst [vmem:[#allocation6] sm:$0x3] %v80
    // Predicated region
    $region14: #{tpu_custom_call.1} parent=1 // pred_check
      _
    $region15: #{tpu_custom_call.1} parent=1 // pred_check_branch
      %83 = sbr.rel (0) target = $region17
    $region16: #{tpu_custom_call.1} parent=1 // pred_region
      %s85 = ssub.s32 32, 32
      %86 = vsyncadd [#allocation5], %s85
      %s88 = sshll.u32 [#allocation6], 4
      %s89 = int_to_ptr.vmem [resolvable:$true] %s88
      %91 = dma.vmem_to_hbm [thread:$0]  %s89, 32, %s2, [#allocation5]
    $region17: #{tpu_custom_call.1} parent=1 // pred_fallthru
      _
    // Predicated region
    $region18: #{tpu_custom_call.1} parent=1 // pred_check
      _
    $region19: #{tpu_custom_call.1} parent=1 // pred_check_branch
      %93 = sbr.rel (0) target = $region21
    $region20: #{tpu_custom_call.1} parent=1 // pred_region
      %94 = dma.done [#allocation5], 32
    $region21: #{tpu_custom_call.1} parent=1 // pred_fallthru
      _
    %95 = vsyncpa [#allocation4], 1
    %96 = vsyncpa [#allocation5], 1

</llo_original>
